<compile_context>
chip_gen: v5e
topology: v5e:2x2
jax: 0.10.0
libtpu: 0.0.40
codegen_flags: <defaults>
</compile_context>

<pallas_src>
import functools

import jax
import jax.numpy as jnp
from jax.experimental import pallas as pl
from jax.experimental.pallas import tpu as pltpu


# ----------------------------------------------------------------------------
# Fused 3-layer kernel: weights VMEM-resident, batch streamed in lane-dense tiles.
# ----------------------------------------------------------------------------
def predictor_kernel(x_ref, w1_ref, b1_ref, w2_ref, b2_ref, w3_ref, b3_ref, o_ref):
    # encoder: Linear (bf16 operands, f32 accumulate) + bias + ReLU in f32.
    # x is cast to bf16 in-kernel so the wrapper never does a pad/cast pass over it.
    h = jnp.dot(x_ref[...].astype(w1_ref.dtype), w1_ref[...],
                preferred_element_type=jnp.float32)
    h = jnp.maximum(h + b1_ref[...], 0.0)
    # mlp layer 1: Linear + bias + ReLU
    h = jnp.dot(h.astype(w2_ref.dtype), w2_ref[...],
                preferred_element_type=jnp.float32)
    h = jnp.maximum(h + b2_ref[...], 0.0)
    # mlp layer 2 (output head): Linear + bias, lane-dense store
    out = jnp.dot(h.astype(w3_ref.dtype), w3_ref[...],
                  preferred_element_type=jnp.float32)
    o_ref[...] = (out + b3_ref[...]).astype(o_ref.dtype)


# ----------------------------------------------------------------------------
# Fallback: per-layer tiled matmul with a reduction ("arbitrary") grid axis and
# an f32 accumulator scratch — used when the bf16 weights exceed the VMEM budget
# (e.g. large `hidden` on v7x's 64 MiB per-TC VMEM).
# ----------------------------------------------------------------------------
def _linear_kernel(x_ref, w_ref, b_ref, o_ref, acc_ref, *, relu):
    @pl.when(pl.program_id(2) == 0)
    def _():
        acc_ref[...] = jnp.zeros_like(acc_ref)

    acc_ref[...] += jnp.dot(x_ref[...].astype(w_ref.dtype), w_ref[...],
                            preferred_element_type=jnp.float32)

    @pl.when(pl.program_id(2) == pl.num_programs(2) - 1)
    def _():
        r = acc_ref[...] + b_ref[...]
        if relu:
            r = jnp.maximum(r, 0.0)
        o_ref[...] = r.astype(o_ref.dtype)


def _round_up(x, m):
    return ((x + m - 1) // m) * m


def _pad2(a, rows, cols, dtype):
    a = a.astype(dtype)
    return jnp.pad(a, ((0, rows - a.shape[0]), (0, cols - a.shape[1])))


def _pick_tile(dim, cap):
    """Largest multiple of 128 that divides `dim` (itself a 128-multiple), <= cap."""
    best = 128
    t = 128
    while t <= min(dim, cap):
        if dim % t == 0:
            best = t
        t += 128
    return best


def _vmem_physical_bytes():
    try:
        return int(pltpu.get_tpu_info().vmem_capacity_bytes)
    except Exception:
        return 64 << 20  # conservative (v7x per-TC VMEM)


def _tiled_linear(x, w, b, *, relu, out_dtype):
    """y = act(x @ w + b) with (M, N, K) grid; K is the reduction axis (last)."""
    M, K = x.shape
    _, N = w.shape
    Mp = _round_up(M, 128)
    if Mp != M:
        x = jnp.pad(x, ((0, Mp - M), (0, 0)))
    # 512-capped tiles: worst-case working set (~6.5 MiB) fits every generation's
    # default scoped VMEM limit, so no extra budget logic is needed here.
    tm = _pick_tile(Mp, 512)
    tn = _pick_tile(N, 512)
    tk = _pick_tile(K, 512)

    flops = 2 * Mp * N * K
    bytes_accessed = (x.size * x.dtype.itemsize + w.size * w.dtype.itemsize
                      + b.size * 4 + Mp * N * jnp.dtype(out_dtype).itemsize)

    return pl.pallas_call(
        functools.partial(_linear_kernel, relu=relu),
        out_shape=jax.ShapeDtypeStruct((Mp, N), out_dtype),
        grid=(Mp // tm, N // tn, K // tk),
        in_specs=[
            pl.BlockSpec((tm, tk), lambda i, j, k: (i, k)),
            pl.BlockSpec((tk, tn), lambda i, j, k: (k, j)),
            pl.BlockSpec((1, tn), lambda i, j, k: (0, j)),
        ],
        out_specs=pl.BlockSpec((tm, tn), lambda i, j, k: (i, j)),
        scratch_shapes=[pltpu.VMEM((tm, tn), jnp.float32)],
        compiler_params=pltpu.CompilerParams(
            dimension_semantics=("parallel", "parallel", "arbitrary")),
        cost_estimate=pl.CostEstimate(
            flops=flops, transcendentals=0, bytes_accessed=bytes_accessed),
    )(x, w, b)


# ----------------------------------------------------------------------------
# One-time parameter prep (pad feature dims to 128-multiples, cast weights to
# bf16) — hoisted out of the per-call forward path.
# ----------------------------------------------------------------------------
def prepare_params(w1, b1, w2, b2, w3, b3):
    in_dim, hidden = w1.shape
    out_dim = w3.shape[1]
    Kp, Hp, Op = (_round_up(d, 128) for d in (in_dim, hidden, out_dim))
    return {
        "dims": (in_dim, hidden, out_dim),
        "w1": _pad2(w1, Kp, Hp, jnp.bfloat16),
        "b1": _pad2(b1, 1, Hp, jnp.float32),
        "w2": _pad2(w2, Hp, Hp, jnp.bfloat16),
        "b2": _pad2(b2, 1, Hp, jnp.float32),
        "w3": _pad2(w3, Hp, Op, jnp.bfloat16),
        "b3": _pad2(b3, 1, Op, jnp.float32),
    }


def predictor_forward(x, params, *, tile_b=None, out_dtype=jnp.float32,
                      force_tiled=False):
    B = x.shape[0]
    in_dim, hidden, out_dim = params["dims"]
    w1p, b1p = params["w1"], params["b1"]
    w2p, b2p = params["w2"], params["b2"]
    w3p, b3p = params["w3"], params["b3"]
    Kp, Hp = w1p.shape
    Op = w3p.shape[1]

    # Pad x's feature dim only if needed (zero padding hits zero weight rows).
    if x.shape[1] != Kp:
        x = jnp.pad(x, ((0, 0), (0, Kp - x.shape[1])))

    x_bpe = x.dtype.itemsize
    o_bpe = jnp.dtype(out_dtype).itemsize
    weight_bytes = ((w1p.size + w2p.size + w3p.size) * 2
                    + (b1p.size + b2p.size + b3p.size) * 4)

    vmem_phys = _vmem_physical_bytes()
    budget = int(vmem_phys * 0.75)

    def fused_vmem(tb):
        # single-buffered weights + double-buffered x/out tiles + live f32/bf16
        # intermediates (conservative 3x tb*Hp*4).
        return (weight_bytes
                + 2 * tb * Kp * x_bpe
                + 2 * tb * Op * o_bpe
                + 3 * tb * Hp * 4)

    if tile_b is None:
        # >=128 rows to engage the MXU; aim for >=4 grid steps so both v7x
        # TensorCores get work and the x/out double-buffer pipeline overlaps.
        tile_b = max(128, min(1024, _round_up(max(1, _round_up(B, 128) // 4), 128)))
    while tile_b > 128 and fused_vmem(tile_b) > budget:
        tile_b //= 2

    use_tiled = force_tiled or fused_vmem(tile_b) > budget

    if use_tiled:
        # Weights too large to stay VMEM-resident (e.g. big `hidden` on v7x):
        # hidden/contract axis tiled per layer, intermediates stream via HBM in bf16.
        h = _tiled_linear(x, w1p, b1p, relu=True, out_dtype=jnp.bfloat16)
        h = _tiled_linear(h, w2p, b2p, relu=True, out_dtype=jnp.bfloat16)
        out = _tiled_linear(h, w3p, b3p, relu=False, out_dtype=out_dtype)
        return out[:B, :out_dim]

    Bp = _round_up(B, tile_b)
    xp = jnp.pad(x, ((0, Bp - B), (0, 0))) if Bp != B else x

    flops = 2 * Bp * (Kp * Hp + Hp * Hp + Hp * Op)
    bytes_accessed = (xp.size * x_bpe + weight_bytes + Bp * Op * o_bpe)
    vmem_limit = int(min(max(fused_vmem(tile_b) * 1.3, 16 << 20), vmem_phys * 0.9))

    resident = dict(pipeline_mode=pl.Buffered(1))  # constant index_map -> 1 buffer

    out_padded = pl.pallas_call(
        predictor_kernel,
        out_shape=jax.ShapeDtypeStruct((Bp, Op), out_dtype),
        grid=(Bp // tile_b,),
        in_specs=[
            pl.BlockSpec((tile_b, Kp), lambda i: (i, 0)),            # x tile (pipelined)
            pl.BlockSpec((Kp, Hp), lambda i: (0, 0), **resident),    # w1 (VMEM-resident)
            pl.BlockSpec((1, Hp), lambda i: (0, 0), **resident),     # b1
            pl.BlockSpec((Hp, Hp), lambda i: (0, 0), **resident),    # w2
            pl.BlockSpec((1, Hp), lambda i: (0, 0), **resident),     # b2
            pl.BlockSpec((Hp, Op), lambda i: (0, 0), **resident),    # w3
            pl.BlockSpec((1, Op), lambda i: (0, 0), **resident),     # b3
        ],
        out_specs=pl.BlockSpec((tile_b, Op), lambda i: (i, 0)),
        compiler_params=pltpu.CompilerParams(
            dimension_semantics=("parallel",),   # shard batch across TCs (v7x)
            vmem_limit_bytes=vmem_limit,
        ),
        cost_estimate=pl.CostEstimate(
            flops=flops, transcendentals=0, bytes_accessed=bytes_accessed),
    )(xp, w1p, b1p, w2p, b2p, w3p, b3p)

    if Bp != B or Op != out_dim:
        out_padded = out_padded[:B, :out_dim]
    return out_padded


# ----------------------------------------------------------------------------
# Parameter init (PyTorch nn.Linear style) + bf16-matched pure-JAX reference.
# ----------------------------------------------------------------------------
def init_params(key, in_dim, hidden, out_dim):
    ks = jax.random.split(key, 6)

    def lin(kw, kb, fan_in, fan_out):
        bound = 1.0 / jnp.sqrt(fan_in)
        w = jax.random.uniform(kw, (fan_in, fan_out), jnp.float32, -bound, bound)
        b = jax.random.uniform(kb, (1, fan_out), jnp.float32, -bound, bound)
        return w, b

    w1, b1 = lin(ks[0], ks[1], in_dim, hidden)   # encoder
    w2, b2 = lin(ks[2], ks[3], hidden, hidden)   # mlp hidden layer
    w3, b3 = lin(ks[4], ks[5], hidden, out_dim)  # mlp output head
    return w1, b1, w2, b2, w3, b3


def reference_forward(x, w1, b1, w2, b2, w3, b3):
    # Same precision recipe as the kernel: bf16 MXU operands, f32 accumulate/epilogue.
    bf = jnp.bfloat16
    h = jnp.dot(x.astype(bf), w1.astype(bf), preferred_element_type=jnp.float32)
    h = jnp.maximum(h + b1, 0.0)
    h = jnp.dot(h.astype(bf), w2.astype(bf), preferred_element_type=jnp.float32)
    h = jnp.maximum(h + b2, 0.0)
    return jnp.dot(h.astype(bf), w3.astype(bf), preferred_element_type=jnp.float32) + b3


if __name__ == "__main__":
    key = jax.random.PRNGKey(0)
    k_x, k_p = jax.random.split(key)

    batch, in_dim, hidden, out_dim = 8, 32, 32, 8
    x = jax.random.normal(k_x, (batch, in_dim), jnp.float32)
    raw_params = init_params(k_p, in_dim, hidden, out_dim)
    params = prepare_params(*raw_params)        # one-time pad + bf16 cast

    ref = reference_forward(x, *raw_params)

    # Fused (weights VMEM-resident) path.
    out = jax.block_until_ready(predictor_forward(x, params))
    assert out.shape == (batch, out_dim)
    assert jnp.allclose(out, ref, atol=2e-3, rtol=2e-3), (
        f"fused max abs err {float(jnp.max(jnp.abs(out - ref)))}")

    # Hidden-axis-tiled fallback path (what large `hidden` on v7x would take).
    out_tiled = jax.block_until_ready(predictor_forward(x, params, force_tiled=True))
    assert out_tiled.shape == (batch, out_dim)
    assert jnp.allclose(out_tiled, ref, atol=2e-3, rtol=2e-3), (
        f"tiled max abs err {float(jnp.max(jnp.abs(out_tiled - ref)))}")

    print("KERNEL_OK")
</pallas_src>

<mosaic_0001>
module attributes {stable_mosaic.version = 11 : i64} {
  func.func @predictor_kernel(%arg0: i32, %arg1: memref<128x128xf32, #tpu.memory_space<vmem>>, %arg2: memref<128x128xbf16, #tpu.memory_space<vmem>>, %arg3: memref<1x128xf32, #tpu.memory_space<vmem>>, %arg4: memref<128x128xbf16, #tpu.memory_space<vmem>>, %arg5: memref<1x128xf32, #tpu.memory_space<vmem>>, %arg6: memref<128x128xbf16, #tpu.memory_space<vmem>>, %arg7: memref<1x128xf32, #tpu.memory_space<vmem>>, %arg8: memref<128x128xf32, #tpu.memory_space<vmem>>) attributes {dimension_semantics = [#tpu.dimension_semantics<parallel>], iteration_bounds = array<i64: 1>, scalar_prefetch = 0 : i64, scratch_operands = 0 : i64, tpu.core_type = #tpu.core_type<tc>, window_params = [{transform_indices = @transform_0, window_bounds = array<i64: 128, 128>}, {pipeline_mode = #tpu.pipeline_mode<synchronous>, transform_indices = @transform_1, window_bounds = array<i64: 128, 128>}, {pipeline_mode = #tpu.pipeline_mode<synchronous>, transform_indices = @transform_2, window_bounds = array<i64: 1, 128>}, {pipeline_mode = #tpu.pipeline_mode<synchronous>, transform_indices = @transform_3, window_bounds = array<i64: 128, 128>}, {pipeline_mode = #tpu.pipeline_mode<synchronous>, transform_indices = @transform_4, window_bounds = array<i64: 1, 128>}, {pipeline_mode = #tpu.pipeline_mode<synchronous>, transform_indices = @transform_5, window_bounds = array<i64: 128, 128>}, {pipeline_mode = #tpu.pipeline_mode<synchronous>, transform_indices = @transform_6, window_bounds = array<i64: 1, 128>}, {transform_indices = @transform_7, window_bounds = array<i64: 128, 128>}]} {
    %c0 = arith.constant 0 : index
    %c0_0 = arith.constant 0 : index
    %0 = vector.load %arg1[%c0, %c0_0] : memref<128x128xf32, #tpu.memory_space<vmem>>, vector<128x128xf32>
    %1 = arith.truncf %0 : vector<128x128xf32> to vector<128x128xbf16>
    %c0_1 = arith.constant 0 : index
    %c0_2 = arith.constant 0 : index
    %2 = vector.load %arg2[%c0_1, %c0_2] : memref<128x128xbf16, #tpu.memory_space<vmem>>, vector<128x128xbf16>
    %cst = arith.constant dense<0.000000e+00> : vector<128x128xf32>
    %3 = tpu.matmul %1, %2, %cst {dimension_numbers = #tpu.dot_dimension_numbers<[1], [0], [0], [1], [0, 0, 1, 1], [], []>} : vector<128x128xbf16>, vector<128x128xbf16>, vector<128x128xf32> -> vector<128x128xf32>
    %c0_3 = arith.constant 0 : index
    %c0_4 = arith.constant 0 : index
    %4 = vector.load %arg3[%c0_3, %c0_4] : memref<1x128xf32, #tpu.memory_space<vmem>>, vector<1x128xf32>
    %5 = vector.broadcast %4 : vector<1x128xf32> to vector<128x128xf32>
    %6 = arith.addf %3, %5 : vector<128x128xf32>
    %cst_5 = arith.constant 0.000000e+00 : f32
    %7 = vector.broadcast %cst_5 : f32 to vector<128x128xf32>
    %8 = arith.maximumf %6, %7 : vector<128x128xf32>
    %9 = arith.truncf %8 : vector<128x128xf32> to vector<128x128xbf16>
    %c0_6 = arith.constant 0 : index
    %c0_7 = arith.constant 0 : index
    %10 = vector.load %arg4[%c0_6, %c0_7] : memref<128x128xbf16, #tpu.memory_space<vmem>>, vector<128x128xbf16>
    %cst_8 = arith.constant dense<0.000000e+00> : vector<128x128xf32>
    %11 = tpu.matmul %9, %10, %cst_8 {dimension_numbers = #tpu.dot_dimension_numbers<[1], [0], [0], [1], [0, 0, 1, 1], [], []>} : vector<128x128xbf16>, vector<128x128xbf16>, vector<128x128xf32> -> vector<128x128xf32>
    %c0_9 = arith.constant 0 : index
    %c0_10 = arith.constant 0 : index
    %12 = vector.load %arg5[%c0_9, %c0_10] : memref<1x128xf32, #tpu.memory_space<vmem>>, vector<1x128xf32>
    %13 = vector.broadcast %12 : vector<1x128xf32> to vector<128x128xf32>
    %14 = arith.addf %11, %13 : vector<128x128xf32>
    %cst_11 = arith.constant 0.000000e+00 : f32
    %15 = vector.broadcast %cst_11 : f32 to vector<128x128xf32>
    %16 = arith.maximumf %14, %15 : vector<128x128xf32>
    %17 = arith.truncf %16 : vector<128x128xf32> to vector<128x128xbf16>
    %c0_12 = arith.constant 0 : index
    %c0_13 = arith.constant 0 : index
    %18 = vector.load %arg6[%c0_12, %c0_13] : memref<128x128xbf16, #tpu.memory_space<vmem>>, vector<128x128xbf16>
    %cst_14 = arith.constant dense<0.000000e+00> : vector<128x128xf32>
    %19 = tpu.matmul %17, %18, %cst_14 {dimension_numbers = #tpu.dot_dimension_numbers<[1], [0], [0], [1], [0, 0, 1, 1], [], []>} : vector<128x128xbf16>, vector<128x128xbf16>, vector<128x128xf32> -> vector<128x128xf32>
    %c0_15 = arith.constant 0 : index
    %c0_16 = arith.constant 0 : index
    %20 = vector.load %arg7[%c0_15, %c0_16] : memref<1x128xf32, #tpu.memory_space<vmem>>, vector<1x128xf32>
    %21 = vector.broadcast %20 : vector<1x128xf32> to vector<128x128xf32>
    %22 = arith.addf %19, %21 : vector<128x128xf32>
    %c0_17 = arith.constant 0 : index
    %c0_18 = arith.constant 0 : index
    %23 = vector.load %arg8[%c0_17, %c0_18] : memref<128x128xf32, #tpu.memory_space<vmem>>, vector<128x128xf32>
    tpu.vector_store %arg8[%c0_17, %c0_18], %22 {strides = array<i32>} : memref<128x128xf32, #tpu.memory_space<vmem>>, vector<128x128xf32>,
    return
  }
  func.func @transform_0(%arg0: i32) -> (i32, i32) {
    %c0_i32 = arith.constant 0 : i32
    %c0_i32_0 = arith.constant 0 : i32
    return %arg0, %c0_i32 : i32, i32
  }
  func.func @transform_1(%arg0: i32) -> (i32, i32) {
    %c0_i32 = arith.constant 0 : i32
    %c0_i32_0 = arith.constant 0 : i32
    %c0_i32_1 = arith.constant 0 : i32
    return %c0_i32, %c0_i32_0 : i32, i32
  }
  func.func @transform_2(%arg0: i32) -> (i32, i32) {
    %c0_i32 = arith.constant 0 : i32
    %c0_i32_0 = arith.constant 0 : i32
    %c0_i32_1 = arith.constant 0 : i32
    return %c0_i32, %c0_i32_0 : i32, i32
  }
  func.func @transform_3(%arg0: i32) -> (i32, i32) {
    %c0_i32 = arith.constant 0 : i32
    %c0_i32_0 = arith.constant 0 : i32
    %c0_i32_1 = arith.constant 0 : i32
    return %c0_i32, %c0_i32_0 : i32, i32
  }
  func.func @transform_4(%arg0: i32) -> (i32, i32) {
    %c0_i32 = arith.constant 0 : i32
    %c0_i32_0 = arith.constant 0 : i32
    %c0_i32_1 = arith.constant 0 : i32
    return %c0_i32, %c0_i32_0 : i32, i32
  }
  func.func @transform_5(%arg0: i32) -> (i32, i32) {
    %c0_i32 = arith.constant 0 : i32
    %c0_i32_0 = arith.constant 0 : i32
    %c0_i32_1 = arith.constant 0 : i32
    return %c0_i32, %c0_i32_0 : i32, i32
  }
  func.func @transform_6(%arg0: i32) -> (i32, i32) {
    %c0_i32 = arith.constant 0 : i32
    %c0_i32_0 = arith.constant 0 : i32
    %c0_i32_1 = arith.constant 0 : i32
    return %c0_i32, %c0_i32_0 : i32, i32
  }
  func.func @transform_7(%arg0: i32) -> (i32, i32) {
    %c0_i32 = arith.constant 0 : i32
    %c0_i32_0 = arith.constant 0 : i32
    return %arg0, %c0_i32 : i32, i32
  }
}

</mosaic_0001>

<llo_original>
// kernel: tpu_custom_call.1
$region0: #{tpu_custom_call.1}
  #allocation0 [shape = 'u32[]', space=smem, size = 0x4, offset = 0x4, fixed_abs, tag = 'smem constant byte address 0x4 - core index']
  #allocation1 [shape = 'u32[72,128]{1,0:T(1,128)}', space=vmem, size = 0x9000, scoped, tag = 'internal scratch']
  %s0 = inlined_call_operand.hbm [shape: f32[128,128], index: 0, kind: input, shape index: {}]
  %s1 = inlined_call_operand.hbm [shape: bf16[128,128], index: 1, kind: input, shape index: {}]
  %s2 = inlined_call_operand.vmem [shape: f32[1,128], index: 2, kind: input, shape index: {}]
  %s3 = inlined_call_operand.hbm [shape: bf16[128,128], index: 3, kind: input, shape index: {}]
  %s4 = inlined_call_operand.vmem [shape: f32[1,128], index: 4, kind: input, shape index: {}]
  %s5 = inlined_call_operand.hbm [shape: bf16[128,128], index: 5, kind: input, shape index: {}]
  %s6 = inlined_call_operand.vmem [shape: f32[1,128], index: 6, kind: input, shape index: {}]
  %s7 = inlined_call_operand.hbm [shape: f32[128,128], index: 7, kind: output, shape index: {}]
  %s8 = sld [smem:[#allocation0]]
  $region54: #{tpu_custom_call.1} parent=0
    _
  %s10 = ssub.s32 1, %s8
  %s11 = scalar_select 0, %s10, %s8
  $region1: #{tpu_custom_call.1} parent=0
    #allocation2 [shape = 'u8[65536]{0}', space=vmem, size = 0x10000, scoped, tag = 'input window, operand 0, single buffered']
    #allocation3 [shape = 's32[1]{0}', space=sflag, size = 0x4, scoped, tag = 'scoped memory for tpu_custom_call.1']
    #allocation4 [shape = 's32[1]{0}', space=sflag, size = 0x4, scoped, tag = 'scoped memory for tpu_custom_call.1']
    #allocation5 [shape = 'u8[32768]{0}', space=vmem, size = 0x8000, scoped, tag = 'input window, operand 1, single buffered']
    #allocation6 [shape = 's32[1]{0}', space=sflag, size = 0x4, scoped, tag = 'scoped memory for tpu_custom_call.1']
    #allocation7 [shape = 'u8[32768]{0}', space=vmem, size = 0x8000, scoped, tag = 'input window, operand 3, single buffered']
    #allocation8 [shape = 'u8[32768]{0}', space=vmem, size = 0x8000, scoped, tag = 'input window, operand 5, single buffered']
    #allocation9 [shape = 's32[1]{0}', space=sflag, size = 0x4, scoped, tag = 'scoped memory for tpu_custom_call.1']
    #allocation10 [shape = 'u8[65536]{0}', space=vmem, size = 0x10000, scoped, tag = 'output window, operand 0, single buffered']
    %12 = vsyncpa [#allocation3], 0
    %13 = vsyncpa [#allocation6], 0
    %14 = vsyncpa [#allocation9], 0
    %15 = vsyncpa [#allocation4], 0
    // Predicated region
    $region2: #{tpu_custom_call.1} parent=1 // pred_check
      _
    $region3: #{tpu_custom_call.1} parent=1 // pred_check_branch
      %17 = sbr.rel (0) target = $region5
    $region4: #{tpu_custom_call.1} parent=1 // pred_region
      %19 = vsyncadd [#allocation3], 0
      %s20 = sshll.u32 %s0, 4
      %s21 = int_to_ptr.hbm [resolvable:$true] %s20
      %s22 = sshll.u32 [#allocation2], 4
      %s23 = int_to_ptr.vmem [resolvable:$true] %s22
      %28 = dma.hbm_to_vmem [thread:$0]  %s21, 2048, %s23, [#allocation3], 128, 128, 8
    $region5: #{tpu_custom_call.1} parent=1 // pred_fallthru
      _
    // Predicated region
    $region6: #{tpu_custom_call.1} parent=1 // pred_check
      _
    $region7: #{tpu_custom_call.1} parent=1 // pred_check_branch
      %30 = sbr.rel (0) target = $region9
    $region8: #{tpu_custom_call.1} parent=1 // pred_region
      %32 = vsyncadd [#allocation6], 0
      %s33 = sshll.u32 %s1, 4
      %s34 = int_to_ptr.hbm [resolvable:$true] %s33
      %s35 = sshll.u32 [#allocation5], 4
      %s36 = int_to_ptr.vmem [resolvable:$true] %s35
      %41 = dma.hbm_to_vmem [thread:$0]  %s34, 1024, %s36, [#allocation6], 64, 64, 4
    $region9: #{tpu_custom_call.1} parent=1 // pred_fallthru
      _
    // Predicated region
    $region10: #{tpu_custom_call.1} parent=1 // pred_check
      _
    $region11: #{tpu_custom_call.1} parent=1 // pred_check_branch
      %43 = sbr.rel (0) target = $region13
    $region12: #{tpu_custom_call.1} parent=1 // pred_region
      _
    $region13: #{tpu_custom_call.1} parent=1 // pred_fallthru
      _
    // Predicated region
    $region14: #{tpu_custom_call.1} parent=1 // pred_check
      _
    $region15: #{tpu_custom_call.1} parent=1 // pred_check_branch
      %45 = sbr.rel (0) target = $region17
    $region16: #{tpu_custom_call.1} parent=1 // pred_region
      %47 = vsyncadd [#allocation6], 0
      %s48 = sshll.u32 %s3, 4
      %s49 = int_to_ptr.hbm [resolvable:$true] %s48
      %s50 = sshll.u32 [#allocation7], 4
      %s51 = int_to_ptr.vmem [resolvable:$true] %s50
      %56 = dma.hbm_to_vmem [thread:$0]  %s49, 1024, %s51, [#allocation6], 64, 64, 4
    $region17: #{tpu_custom_call.1} parent=1 // pred_fallthru
      _
    // Predicated region
    $region18: #{tpu_custom_call.1} parent=1 // pred_check
      _
    $region19: #{tpu_custom_call.1} parent=1 // pred_check_branch
      %58 = sbr.rel (0) target = $region21
    $region20: #{tpu_custom_call.1} parent=1 // pred_region
      _
    $region21: #{tpu_custom_call.1} parent=1 // pred_fallthru
      _
    // Predicated region
    $region22: #{tpu_custom_call.1} parent=1 // pred_check
      _
    $region23: #{tpu_custom_call.1} parent=1 // pred_check_branch
      %60 = sbr.rel (0) target = $region25
    $region24: #{tpu_custom_call.1} parent=1 // pred_region
      %62 = vsyncadd [#allocation9], 0
      %s63 = sshll.u32 %s5, 4
      %s64 = int_to_ptr.hbm [resolvable:$true] %s63
      %s65 = sshll.u32 [#allocation8], 4
      %s66 = int_to_ptr.vmem [resolvable:$true] %s65
      %71 = dma.hbm_to_vmem [thread:$0]  %s64, 1024, %s66, [#allocation9], 64, 64, 4
    $region25: #{tpu_custom_call.1} parent=1 // pred_fallthru
      _
    // Predicated region
    $region26: #{tpu_custom_call.1} parent=1 // pred_check
      _
    $region27: #{tpu_custom_call.1} parent=1 // pred_check_branch
      %73 = sbr.rel (0) target = $region29
    $region28: #{tpu_custom_call.1} parent=1 // pred_region
      _
    $region29: #{tpu_custom_call.1} parent=1 // pred_fallthru
      _
    // Predicated region
    $region30: #{tpu_custom_call.1} parent=1 // pred_check
      _
    $region31: #{tpu_custom_call.1} parent=1 // pred_check_branch
      %75 = sbr.rel (0) target = $region33
    $region32: #{tpu_custom_call.1} parent=1 // pred_region
      %77 = dma.done [#allocation3], 2048
    $region33: #{tpu_custom_call.1} parent=1 // pred_fallthru
      _
    // Predicated region
    $region34: #{tpu_custom_call.1} parent=1 // pred_check
      _
    $region35: #{tpu_custom_call.1} parent=1 // pred_check_branch
      %79 = sbr.rel (0) target = $region37
    $region36: #{tpu_custom_call.1} parent=1 // pred_region
      %81 = dma.done [#allocation6], 1024
    $region37: #{tpu_custom_call.1} parent=1 // pred_fallthru
      _
    // Predicated region
    $region38: #{tpu_custom_call.1} parent=1 // pred_check
      _
    $region39: #{tpu_custom_call.1} parent=1 // pred_check_branch
      %83 = sbr.rel (0) target = $region41
    $region40: #{tpu_custom_call.1} parent=1 // pred_region
      %85 = dma.done [#allocation6], 1024
    $region41: #{tpu_custom_call.1} parent=1 // pred_fallthru
      _
    // Predicated region
    $region42: #{tpu_custom_call.1} parent=1 // pred_check
      _
    $region43: #{tpu_custom_call.1} parent=1 // pred_check_branch
      %87 = sbr.rel (0) target = $region45
    $region44: #{tpu_custom_call.1} parent=1 // pred_region
      %89 = dma.done [#allocation9], 1024
    $region45: #{tpu_custom_call.1} parent=1 // pred_fallthru
      _
    %v90 = vld [vmem:[#allocation2] sm:$0xff]
    %v91 = vld [vmem:[#allocation2 + $0x8] sm:$0xff]
    %v92 = vld [vmem:[#allocation2 + $0x10] sm:$0xff]
    %v93 = vld [vmem:[#allocation2 + $0x18] sm:$0xff]
    %v94 = vld [vmem:[#allocation2 + $0x20] sm:$0xff]
    %v95 = vld [vmem:[#allocation2 + $0x28] sm:$0xff]
    %v96 = vld [vmem:[#allocation2 + $0x30] sm:$0xff]
    %v97 = vld [vmem:[#allocation2 + $0x38] sm:$0xff]
    %v98 = vld [vmem:[#allocation2 + $0x40] sm:$0xff]
    %v99 = vld [vmem:[#allocation2 + $0x48] sm:$0xff]
    %v100 = vld [vmem:[#allocation2 + $0x50] sm:$0xff]
    %v101 = vld [vmem:[#allocation2 + $0x58] sm:$0xff]
    %v102 = vld [vmem:[#allocation2 + $0x60] sm:$0xff]
    %v103 = vld [vmem:[#allocation2 + $0x68] sm:$0xff]
    %v104 = vld [vmem:[#allocation2 + $0x70] sm:$0xff]
    %v105 = vld [vmem:[#allocation2 + $0x78] sm:$0xff]
    %v106 = vpack.c.bf16 %v91, %v90
    %v107 = vpack.c.bf16 %v93, %v92
    %v108 = vpack.c.bf16 %v95, %v94
    %v109 = vpack.c.bf16 %v97, %v96
    %v110 = vpack.c.bf16 %v99, %v98
    %v111 = vpack.c.bf16 %v101, %v100
    %v112 = vpack.c.bf16 %v103, %v102
    %v113 = vpack.c.bf16 %v105, %v104
    %v114 = vld [vmem:[#allocation5] sm:$0xf]
    %v115 = vld [vmem:[#allocation5 + $0x4] sm:$0xf]
    %v116 = vld [vmem:[#allocation5 + $0x8] sm:$0xf]
    %v117 = vld [vmem:[#allocation5 + $0xc] sm:$0xf]
    %v118 = vld [vmem:[#allocation5 + $0x10] sm:$0xf]
    %v119 = vld [vmem:[#allocation5 + $0x14] sm:$0xf]
    %v120 = vld [vmem:[#allocation5 + $0x18] sm:$0xf]
    %v121 = vld [vmem:[#allocation5 + $0x1c] sm:$0xf]
    %v122 = vld [vmem:[#allocation5 + $0x20] sm:$0xf]
    %v123 = vld [vmem:[#allocation5 + $0x24] sm:$0xf]
    %v124 = vld [vmem:[#allocation5 + $0x28] sm:$0xf]
    %v125 = vld [vmem:[#allocation5 + $0x2c] sm:$0xf]
    %v126 = vld [vmem:[#allocation5 + $0x30] sm:$0xf]
    %v127 = vld [vmem:[#allocation5 + $0x34] sm:$0xf]
    %v128 = vld [vmem:[#allocation5 + $0x38] sm:$0xf]
    %v129 = vld [vmem:[#allocation5 + $0x3c] sm:$0xf]
    %v130 = vld [vmem:[%s2] sm:$0x1]
    %v132 = vperm.slane %v130, 0
    %v150 = vunpack.c.l.b16 %v114
    %v151 = vunpack.c.l.b16 %v115
    %v152 = vunpack.c.l.b16 %v116
    %v153 = vunpack.c.l.b16 %v117
    %v154 = vunpack.c.l.b16 %v118
    %v155 = vunpack.c.l.b16 %v119
    %v156 = vunpack.c.l.b16 %v120
    %v157 = vunpack.c.l.b16 %v121
    %v158 = vunpack.c.l.b16 %v122
    %v159 = vunpack.c.l.b16 %v123
    %v160 = vunpack.c.l.b16 %v124
    %v161 = vunpack.c.l.b16 %v125
    %v162 = vunpack.c.l.b16 %v126
    %v163 = vunpack.c.l.b16 %v127
    %v164 = vunpack.c.l.b16 %v128
    %v165 = vunpack.c.l.b16 %v129
    %v166 = vpack.c.b16 %v151, %v150
    %v167 = vpack.c.b16 %v153, %v152
    %v168 = vpack.c.b16 %v155, %v154
    %v169 = vpack.c.b16 %v157, %v156
    %v170 = vpack.c.b16 %v159, %v158
    %v171 = vpack.c.b16 %v161, %v160
    %v172 = vpack.c.b16 %v163, %v162
    %v173 = vpack.c.b16 %v165, %v164
    %182 = vmatpush.bf16.msra.mxu0 %v173
    %183 = vmatpush.bf16.msra.mxu0 %v172
    %184 = vmatpush.bf16.msra.mxu0 %v171
    %185 = vmatpush.bf16.msra.mxu0 %v170
    %186 = vmatpush.bf16.msra.mxu0 %v169
    %187 = vmatpush.bf16.msra.mxu0 %v168
    %188 = vmatpush.bf16.msra.mxu0 %v167
    %189 = vmatpush.bf16.msra.mxu0 %v166
    %190 = vmatmul.bf16.gmra.mxu0 %v106
    %v191 = vpop.f32.mrf.mxu0
    %v192 = vadd.f32 %v132, %v191
    %v193 = vpop.f32.mrf.mxu0
    %v194 = vadd.f32 %v132, %v193
    %195 = vmatmul.bf16.gmra.mxu0 %v107
    %v196 = vpop.f32.mrf.mxu0
    %v197 = vadd.f32 %v132, %v196
    %v198 = vpop.f32.mrf.mxu0
    %v199 = vadd.f32 %v132, %v198
    %200 = vmatmul.bf16.gmra.mxu0 %v108
    %v201 = vpop.f32.mrf.mxu0
    %v202 = vadd.f32 %v132, %v201
    %v203 = vpop.f32.mrf.mxu0
    %v204 = vadd.f32 %v132, %v203
    %205 = vmatmul.bf16.gmra.mxu0 %v109
    %v206 = vpop.f32.mrf.mxu0
    %v207 = vadd.f32 %v132, %v206
    %v208 = vpop.f32.mrf.mxu0
    %v209 = vadd.f32 %v132, %v208
    %210 = vmatmul.bf16.gmra.mxu0 %v110
    %v211 = vpop.f32.mrf.mxu0
    %v212 = vadd.f32 %v132, %v211
    %v213 = vpop.f32.mrf.mxu0
    %v214 = vadd.f32 %v132, %v213
    %215 = vmatmul.bf16.gmra.mxu0 %v111
    %v216 = vpop.f32.mrf.mxu0
    %v217 = vadd.f32 %v132, %v216
    %v218 = vpop.f32.mrf.mxu0
    %v219 = vadd.f32 %v132, %v218
    %220 = vmatmul.bf16.gmra.mxu0 %v112
    %v221 = vpop.f32.mrf.mxu0
    %v222 = vadd.f32 %v132, %v221
    %v223 = vpop.f32.mrf.mxu0
    %v224 = vadd.f32 %v132, %v223
    %225 = vmatmul.bf16.gmra.mxu0 %v113
    %v226 = vpop.f32.mrf.mxu0
    %v227 = vadd.f32 %v132, %v226
    %v228 = vpop.f32.mrf.mxu0
    %v229 = vadd.f32 %v132, %v228
    %230 = vdwg.mxu0
    %v231 = vmax.f32 %v192, 0.0
    %v232 = vmax.f32 %v194, 0.0
    %v233 = vmax.f32 %v197, 0.0
    %v234 = vmax.f32 %v199, 0.0
    %v235 = vmax.f32 %v202, 0.0
    %v236 = vmax.f32 %v204, 0.0
    %v237 = vmax.f32 %v207, 0.0
    %v238 = vmax.f32 %v209, 0.0
    %v239 = vmax.f32 %v212, 0.0
    %v240 = vmax.f32 %v214, 0.0
    %v241 = vmax.f32 %v217, 0.0
    %v242 = vmax.f32 %v219, 0.0
    %v243 = vmax.f32 %v222, 0.0
    %v244 = vmax.f32 %v224, 0.0
    %v245 = vmax.f32 %v227, 0.0
    %v246 = vmax.f32 %v229, 0.0
    %v247 = vpack.c.bf16 %v232, %v231
    %v248 = vpack.c.bf16 %v234, %v233
    %v249 = vpack.c.bf16 %v236, %v235
    %v250 = vpack.c.bf16 %v238, %v237
    %v251 = vpack.c.bf16 %v240, %v239
    %v252 = vpack.c.bf16 %v242, %v241
    %v253 = vpack.c.bf16 %v244, %v243
    %v254 = vpack.c.bf16 %v246, %v245
    %v255 = vld [vmem:[#allocation7] sm:$0xf]
    %v256 = vld [vmem:[#allocation7 + $0x4] sm:$0xf]
    %v257 = vld [vmem:[#allocation7 + $0x8] sm:$0xf]
    %v258 = vld [vmem:[#allocation7 + $0xc] sm:$0xf]
    %v259 = vld [vmem:[#allocation7 + $0x10] sm:$0xf]
    %v260 = vld [vmem:[#allocation7 + $0x14] sm:$0xf]
    %v261 = vld [vmem:[#allocation7 + $0x18] sm:$0xf]
    %v262 = vld [vmem:[#allocation7 + $0x1c] sm:$0xf]
    %v263 = vld [vmem:[#allocation7 + $0x20] sm:$0xf]
    %v264 = vld [vmem:[#allocation7 + $0x24] sm:$0xf]
    %v265 = vld [vmem:[#allocation7 + $0x28] sm:$0xf]
    %v266 = vld [vmem:[#allocation7 + $0x2c] sm:$0xf]
    %v267 = vld [vmem:[#allocation7 + $0x30] sm:$0xf]
    %v268 = vld [vmem:[#allocation7 + $0x34] sm:$0xf]
    %v269 = vld [vmem:[#allocation7 + $0x38] sm:$0xf]
    %v270 = vld [vmem:[#allocation7 + $0x3c] sm:$0xf]
    %v271 = vld [vmem:[%s4] sm:$0x1]
    %v273 = vperm.slane %v271, 0
    %v291 = vunpack.c.l.b16 %v255
    %v292 = vunpack.c.l.b16 %v256
    %v293 = vunpack.c.l.b16 %v257
    %v294 = vunpack.c.l.b16 %v258
    %v295 = vunpack.c.l.b16 %v259
    %v296 = vunpack.c.l.b16 %v260
    %v297 = vunpack.c.l.b16 %v261
    %v298 = vunpack.c.l.b16 %v262
    %v299 = vunpack.c.l.b16 %v263
    %v300 = vunpack.c.l.b16 %v264
    %v301 = vunpack.c.l.b16 %v265
    %v302 = vunpack.c.l.b16 %v266
    %v303 = vunpack.c.l.b16 %v267
    %v304 = vunpack.c.l.b16 %v268
    %v305 = vunpack.c.l.b16 %v269
    %v306 = vunpack.c.l.b16 %v270
    %v307 = vpack.c.b16 %v292, %v291
    %v308 = vpack.c.b16 %v294, %v293
    %v309 = vpack.c.b16 %v296, %v295
    %v310 = vpack.c.b16 %v298, %v297
    %v311 = vpack.c.b16 %v300, %v299
    %v312 = vpack.c.b16 %v302, %v301
    %v313 = vpack.c.b16 %v304, %v303
    %v314 = vpack.c.b16 %v306, %v305
    %323 = vmatpush.bf16.msra.mxu0 %v314
    %324 = vmatpush.bf16.msra.mxu0 %v313
    %325 = vmatpush.bf16.msra.mxu0 %v312
    %326 = vmatpush.bf16.msra.mxu0 %v311
    %327 = vmatpush.bf16.msra.mxu0 %v310
    %328 = vmatpush.bf16.msra.mxu0 %v309
    %329 = vmatpush.bf16.msra.mxu0 %v308
    %330 = vmatpush.bf16.msra.mxu0 %v307
    %331 = vmatmul.bf16.gmra.mxu0 %v247
    %v332 = vpop.f32.mrf.mxu0
    %v333 = vadd.f32 %v273, %v332
    %v334 = vpop.f32.mrf.mxu0
    %v335 = vadd.f32 %v273, %v334
    %336 = vmatmul.bf16.gmra.mxu0 %v248
    %v337 = vpop.f32.mrf.mxu0
    %v338 = vadd.f32 %v273, %v337
    %v339 = vpop.f32.mrf.mxu0
    %v340 = vadd.f32 %v273, %v339
    %341 = vmatmul.bf16.gmra.mxu0 %v249
    %v342 = vpop.f32.mrf.mxu0
    %v343 = vadd.f32 %v273, %v342
    %v344 = vpop.f32.mrf.mxu0
    %v345 = vadd.f32 %v273, %v344
    %346 = vmatmul.bf16.gmra.mxu0 %v250
    %v347 = vpop.f32.mrf.mxu0
    %v348 = vadd.f32 %v273, %v347
    %v349 = vpop.f32.mrf.mxu0
    %v350 = vadd.f32 %v273, %v349
    %351 = vmatmul.bf16.gmra.mxu0 %v251
    %v352 = vpop.f32.mrf.mxu0
    %v353 = vadd.f32 %v273, %v352
    %v354 = vpop.f32.mrf.mxu0
    %v355 = vadd.f32 %v273, %v354
    %356 = vmatmul.bf16.gmra.mxu0 %v252
    %v357 = vpop.f32.mrf.mxu0
    %v358 = vadd.f32 %v273, %v357
    %v359 = vpop.f32.mrf.mxu0
    %v360 = vadd.f32 %v273, %v359
    %361 = vmatmul.bf16.gmra.mxu0 %v253
    %v362 = vpop.f32.mrf.mxu0
    %v363 = vadd.f32 %v273, %v362
    %v364 = vpop.f32.mrf.mxu0
    %v365 = vadd.f32 %v273, %v364
    %366 = vmatmul.bf16.gmra.mxu0 %v254
    %v367 = vpop.f32.mrf.mxu0
    %v368 = vadd.f32 %v273, %v367
    %v369 = vpop.f32.mrf.mxu0
    %v370 = vadd.f32 %v273, %v369
    %371 = vdwg.mxu0
    %v372 = vmax.f32 %v333, 0.0
    %v373 = vmax.f32 %v335, 0.0
    %v374 = vmax.f32 %v338, 0.0
    %v375 = vmax.f32 %v340, 0.0
    %v376 = vmax.f32 %v343, 0.0
    %v377 = vmax.f32 %v345, 0.0
    %v378 = vmax.f32 %v348, 0.0
    %v379 = vmax.f32 %v350, 0.0
    %v380 = vmax.f32 %v353, 0.0
    %v381 = vmax.f32 %v355, 0.0
    %v382 = vmax.f32 %v358, 0.0
    %v383 = vmax.f32 %v360, 0.0
    %v384 = vmax.f32 %v363, 0.0
    %v385 = vmax.f32 %v365, 0.0
    %v386 = vmax.f32 %v368, 0.0
    %v387 = vmax.f32 %v370, 0.0
    %v388 = vpack.c.bf16 %v373, %v372
    %v389 = vpack.c.bf16 %v375, %v374
    %v390 = vpack.c.bf16 %v377, %v376
    %v391 = vpack.c.bf16 %v379, %v378
    %v392 = vpack.c.bf16 %v381, %v380
    %v393 = vpack.c.bf16 %v383, %v382
    %v394 = vpack.c.bf16 %v385, %v384
    %v395 = vpack.c.bf16 %v387, %v386
    %v396 = vld [vmem:[#allocation8] sm:$0xf]
    %v397 = vld [vmem:[#allocation8 + $0x4] sm:$0xf]
    %v398 = vld [vmem:[#allocation8 + $0x8] sm:$0xf]
    %v399 = vld [vmem:[#allocation8 + $0xc] sm:$0xf]
    %v400 = vld [vmem:[#allocation8 + $0x10] sm:$0xf]
    %v401 = vld [vmem:[#allocation8 + $0x14] sm:$0xf]
    %v402 = vld [vmem:[#allocation8 + $0x18] sm:$0xf]
    %v403 = vld [vmem:[#allocation8 + $0x1c] sm:$0xf]
    %v404 = vld [vmem:[#allocation8 + $0x20] sm:$0xf]
    %v405 = vld [vmem:[#allocation8 + $0x24] sm:$0xf]
    %v406 = vld [vmem:[#allocation8 + $0x28] sm:$0xf]
    %v407 = vld [vmem:[#allocation8 + $0x2c] sm:$0xf]
    %v408 = vld [vmem:[#allocation8 + $0x30] sm:$0xf]
    %v409 = vld [vmem:[#allocation8 + $0x34] sm:$0xf]
    %v410 = vld [vmem:[#allocation8 + $0x38] sm:$0xf]
    %v411 = vld [vmem:[#allocation8 + $0x3c] sm:$0xf]
    %v412 = vld [vmem:[%s6] sm:$0x1]
    %v414 = vperm.slane %v412, 0
    %v432 = vunpack.c.l.b16 %v396
    %v433 = vunpack.c.l.b16 %v397
    %v434 = vunpack.c.l.b16 %v398
    %v435 = vunpack.c.l.b16 %v399
    %v436 = vunpack.c.l.b16 %v400
    %v437 = vunpack.c.l.b16 %v401
    %v438 = vunpack.c.l.b16 %v402
    %v439 = vunpack.c.l.b16 %v403
    %v440 = vunpack.c.l.b16 %v404
    %v441 = vunpack.c.l.b16 %v405
    %v442 = vunpack.c.l.b16 %v406
    %v443 = vunpack.c.l.b16 %v407
    %v444 = vunpack.c.l.b16 %v408
    %v445 = vunpack.c.l.b16 %v409
    %v446 = vunpack.c.l.b16 %v410
    %v447 = vunpack.c.l.b16 %v411
    %v448 = vpack.c.b16 %v433, %v432
    %v449 = vpack.c.b16 %v435, %v434
    %v450 = vpack.c.b16 %v437, %v436
    %v451 = vpack.c.b16 %v439, %v438
    %v452 = vpack.c.b16 %v441, %v440
    %v453 = vpack.c.b16 %v443, %v442
    %v454 = vpack.c.b16 %v445, %v444
    %v455 = vpack.c.b16 %v447, %v446
    %464 = vmatpush.bf16.msra.mxu0 %v455
    %465 = vmatpush.bf16.msra.mxu0 %v454
    %466 = vmatpush.bf16.msra.mxu0 %v453
    %467 = vmatpush.bf16.msra.mxu0 %v452
    %468 = vmatpush.bf16.msra.mxu0 %v451
    %469 = vmatpush.bf16.msra.mxu0 %v450
    %470 = vmatpush.bf16.msra.mxu0 %v449
    %471 = vmatpush.bf16.msra.mxu0 %v448
    %472 = vmatmul.bf16.gmra.mxu0 %v388
    %v473 = vpop.f32.mrf.mxu0
    %v474 = vadd.f32 %v414, %v473
    %v475 = vpop.f32.mrf.mxu0
    %v476 = vadd.f32 %v414, %v475
    %477 = vmatmul.bf16.gmra.mxu0 %v389
    %v478 = vpop.f32.mrf.mxu0
    %v479 = vadd.f32 %v414, %v478
    %v480 = vpop.f32.mrf.mxu0
    %v481 = vadd.f32 %v414, %v480
    %482 = vmatmul.bf16.gmra.mxu0 %v390
    %v483 = vpop.f32.mrf.mxu0
    %v484 = vadd.f32 %v414, %v483
    %v485 = vpop.f32.mrf.mxu0
    %v486 = vadd.f32 %v414, %v485
    %487 = vmatmul.bf16.gmra.mxu0 %v391
    %v488 = vpop.f32.mrf.mxu0
    %v489 = vadd.f32 %v414, %v488
    %v490 = vpop.f32.mrf.mxu0
    %v491 = vadd.f32 %v414, %v490
    %492 = vmatmul.bf16.gmra.mxu0 %v392
    %v493 = vpop.f32.mrf.mxu0
    %v494 = vadd.f32 %v414, %v493
    %v495 = vpop.f32.mrf.mxu0
    %v496 = vadd.f32 %v414, %v495
    %497 = vmatmul.bf16.gmra.mxu0 %v393
    %v498 = vpop.f32.mrf.mxu0
    %v499 = vadd.f32 %v414, %v498
    %v500 = vpop.f32.mrf.mxu0
    %v501 = vadd.f32 %v414, %v500
    %502 = vmatmul.bf16.gmra.mxu0 %v394
    %v503 = vpop.f32.mrf.mxu0
    %v504 = vadd.f32 %v414, %v503
    %v505 = vpop.f32.mrf.mxu0
    %v506 = vadd.f32 %v414, %v505
    %507 = vmatmul.bf16.gmra.mxu0 %v395
    %v508 = vpop.f32.mrf.mxu0
    %v509 = vadd.f32 %v414, %v508
    %v510 = vpop.f32.mrf.mxu0
    %v511 = vadd.f32 %v414, %v510
    %512 = vdwg.mxu0
    %513 = vst [vmem:[#allocation10] sm:$0xff] %v474
    %514 = vst [vmem:[#allocation10 + $0x8] sm:$0xff] %v476
    %515 = vst [vmem:[#allocation10 + $0x10] sm:$0xff] %v479
    %516 = vst [vmem:[#allocation10 + $0x18] sm:$0xff] %v481
    %517 = vst [vmem:[#allocation10 + $0x20] sm:$0xff] %v484
    %518 = vst [vmem:[#allocation10 + $0x28] sm:$0xff] %v486
    %519 = vst [vmem:[#allocation10 + $0x30] sm:$0xff] %v489
    %520 = vst [vmem:[#allocation10 + $0x38] sm:$0xff] %v491
    %521 = vst [vmem:[#allocation10 + $0x40] sm:$0xff] %v494
    %522 = vst [vmem:[#allocation10 + $0x48] sm:$0xff] %v496
    %523 = vst [vmem:[#allocation10 + $0x50] sm:$0xff] %v499
    %524 = vst [vmem:[#allocation10 + $0x58] sm:$0xff] %v501
    %525 = vst [vmem:[#allocation10 + $0x60] sm:$0xff] %v504
    %526 = vst [vmem:[#allocation10 + $0x68] sm:$0xff] %v506
    %527 = vst [vmem:[#allocation10 + $0x70] sm:$0xff] %v509
    %528 = vst [vmem:[#allocation10 + $0x78] sm:$0xff] %v511
    // Predicated region
    $region46: #{tpu_custom_call.1} parent=1 // pred_check
      _
    $region47: #{tpu_custom_call.1} parent=1 // pred_check_branch
      %530 = sbr.rel (0) target = $region49
    $region48: #{tpu_custom_call.1} parent=1 // pred_region
      %532 = vsyncadd [#allocation4], 0
      %s533 = sshll.u32 [#allocation10], 4
      %s534 = int_to_ptr.vmem [resolvable:$true] %s533
      %s535 = sshll.u32 %s7, 4
      %s536 = int_to_ptr.hbm [resolvable:$true] %s535
      %541 = dma.vmem_to_hbm [thread:$0]  %s534, 2048, %s536, [#allocation4], 128, 128, 8
    $region49: #{tpu_custom_call.1} parent=1 // pred_fallthru
      _
    // Predicated region
    $region50: #{tpu_custom_call.1} parent=1 // pred_check
      _
    $region51: #{tpu_custom_call.1} parent=1 // pred_check_branch
      %543 = sbr.rel (0) target = $region53
    $region52: #{tpu_custom_call.1} parent=1 // pred_region
      %545 = dma.done [#allocation4], 2048
    $region53: #{tpu_custom_call.1} parent=1 // pred_fallthru
      _
    %546 = vsyncpa [#allocation3], 1
    %547 = vsyncpa [#allocation6], 1
    %548 = vsyncpa [#allocation9], 1
    %549 = vsyncpa [#allocation4], 1

</llo_original>
